<compile_context>
chip_gen: v6e
topology: v6e:2x2x1
jax: 0.10.0
libtpu: 0.0.40
codegen_flags: <defaults>
</compile_context>

<pallas_src>
import jax
import jax.numpy as jnp
from jax.experimental import pallas as pl
from jax.experimental.pallas import tpu as pltpu

# Model hyper-parameters implied by nn.Conv2d(1, 10, kernel_size=10)
C_IN = 1
C_OUT = 10
K = 10

C_PAD = 128          # channel axis padded to a full vreg lane width
B_TILE_MAX = 1024    # upper bound on images per grid step
NEG_BIG = -1e30      # bias for padded channels (finite, so z - m never -> NaN)


def fused_conv_mean_logsoftmax_kernel(x_ref, w_ref, b_ref, o_ref):
    """One batch tile per grid step.

    x_ref: (B_TILE, HW_PAD)   bf16 flattened images (lane-dense spatial axis)
    w_ref: (HW_PAD, C_PAD)    bf16 conv+mean folded weights (resident)
    b_ref: (1, C_PAD)         f32 bias (-1e30 on padded channels, resident)
    o_ref: (B_TILE, C_PAD)    f32 log-softmax output (full 128-lane store)
    """
    # conv + spatial mean + bias in one bf16 MXU contraction, f32 accumulate.
    logits = jnp.dot(x_ref[...], w_ref[...],
                     preferred_element_type=jnp.float32) + b_ref[...]

    # Numerically stable log_softmax over the (full-width) channel lane axis.
    # Padded channels sit at -1e30: they never win the max and exp() underflows
    # to exactly 0, so real channels match the 10-wide log_softmax exactly.
    m = jnp.max(logits, axis=-1, keepdims=True)
    z = logits - m
    lse = jnp.log(jnp.sum(jnp.exp(z), axis=-1, keepdims=True))
    o_ref[...] = z - lse


def _round_up(v, m):
    return ((v + m - 1) // m) * m


def _pick_b_tile(n, hw_pad):
    """Largest multiple-of-8 batch tile that fits a conservative VMEM budget,
    capped so the (parallel) batch grid keeps >= 2 steps when N allows."""
    budget = 20 * 1024 * 1024                    # headroom vs v7x 32 MiB scoped default
    resident = 2 * hw_pad * C_PAD * 2            # folded bf16 weights (+ slack)
    per_row = 2 * (hw_pad * 2 + C_PAD * 4)       # double-buffered bf16 in + f32 out
    b = max(1, budget - resident) // per_row
    b = max(8, min(B_TILE_MAX, (b // 8) * 8))
    if n > 16:
        # Keep >= 2 grid steps so both v7x TensorCores get work and the input
        # pipeline has something to overlap.  Neutral on v5e/v6e (1 TC).
        b = min(b, _round_up(pl.cdiv(n, 2), 8))
    b = min(b, _round_up(n, 8))                  # never bigger than the batch
    return b


def _fold_conv_mean_weights(w_oihw, H, W, hw_pad):
    """Fold Conv2d('valid') + spatial mean into one (hw_pad, C_PAD) matrix.

    mean_{p,q} conv(x, w)[c] = (1/(Ho*Wo)) * sum_{ki,kj} w[c,ki,kj] * S[ki,kj]
    with S[ki,kj] the box-sum of x over the Ho x Wo window at offset (ki,kj).
    Pushing the box-sum onto the (static) weights gives
      Weff[h, w, c] = (1/(Ho*Wo)) * sum_{ki<=h<ki+Ho, kj<=w<kj+Wo} w[c, ki, kj]
    Weight-only preprocessing, done once outside the kernel.  Padded spatial
    rows and padded channel columns are zero.
    """
    Ho, Wo = H - K + 1, W - K + 1
    wk = w_oihw[:, 0].astype(jnp.float32)                                    # (C_OUT, K, K)
    kk = jnp.arange(K)
    a_h = ((jnp.arange(H)[None, :] >= kk[:, None]) &
           (jnp.arange(H)[None, :] < kk[:, None] + Ho)).astype(jnp.float32)  # (K, H)
    a_w = ((jnp.arange(W)[None, :] >= kk[:, None]) &
           (jnp.arange(W)[None, :] < kk[:, None] + Wo)).astype(jnp.float32)  # (K, W)
    weff = jnp.einsum('ckl,kh,lw->hwc', wk, a_h, a_w) / float(Ho * Wo)       # (H, W, C_OUT)
    weff = weff.reshape(H * W, C_OUT)
    weff = jnp.pad(weff, ((0, hw_pad - H * W), (0, C_PAD - C_OUT)))          # (hw_pad, C_PAD)
    return weff


def net_forward(x_nchw, w_oihw, bias):
    """Pallas forward pass. x_nchw: (N, 1, H, W) -> (N, C_OUT) f32."""
    N, C, H, W = x_nchw.shape
    assert C == C_IN, "Net expects a single input channel"
    assert H >= K and W >= K, "spatial dims must be >= kernel_size=10"

    HW = H * W
    hw_pad = _round_up(HW, 128)          # keep the contraction (lane) axis vreg-aligned

    # Parameter preprocessing (once per call; tiny): fold conv+mean, pad
    # channels to 128, stream weights as bf16, keep bias in f32.
    w_flat = _fold_conv_mean_weights(w_oihw, H, W, hw_pad).astype(jnp.bfloat16)
    b = jnp.full((1, C_PAD), NEG_BIG, jnp.float32)
    b = b.at[0, :C_OUT].set(bias.astype(jnp.float32))

    # Lane-dense, sublane-batched input: (N, hw_pad) bf16 with spatial on lanes.
    # (If the caller already holds bf16 activations, the cast is a no-op; the
    #  reshape of the C=1 axis is layout-only.)
    x_flat = x_nchw[:, 0].reshape(N, HW).astype(jnp.bfloat16)
    if hw_pad != HW:
        x_flat = jnp.pad(x_flat, ((0, 0), (0, hw_pad - HW)))

    b_tile = _pick_b_tile(N, hw_pad)
    grid = (pl.cdiv(N, b_tile),)         # ragged tail handled by masked edge block

    out = pl.pallas_call(
        fused_conv_mean_logsoftmax_kernel,
        out_shape=jax.ShapeDtypeStruct((N, C_PAD), jnp.float32),
        grid_spec=pltpu.PrefetchScalarGridSpec(
            num_scalar_prefetch=0,
            grid=grid,
            in_specs=[
                pl.BlockSpec((b_tile, hw_pad), lambda n: (n, 0)),   # streaming batch tile
                pl.BlockSpec((hw_pad, C_PAD), lambda n: (0, 0)),    # folded weights (resident)
                pl.BlockSpec((1, C_PAD), lambda n: (0, 0)),         # bias (resident)
            ],
            out_specs=pl.BlockSpec((b_tile, C_PAD), lambda n: (n, 0)),
        ),
        compiler_params=pltpu.CompilerParams(
            dimension_semantics=("parallel",),
        ),
    )(x_flat, w_flat, b)
    # Drop the padded channel columns; batch axis is already exactly N.
    return out[:, :C_OUT]


net_forward = jax.jit(net_forward)


def reference_forward(x_nchw, w_oihw, bias):
    """Pure-JAX reference matching the PyTorch forward (f32 throughout)."""
    y = jax.lax.conv_general_dilated(
        x_nchw, w_oihw, window_strides=(1, 1), padding="VALID",
        dimension_numbers=("NCHW", "OIHW", "NCHW"))
    y = y + bias[None, :, None, None]
    y = jnp.mean(y, axis=(2, 3))
    return jax.nn.log_softmax(y, axis=1)


if __name__ == "__main__":
    key = jax.random.PRNGKey(0)
    kx, kw, kb = jax.random.split(key, 3)

    # Small shapes consistent with the module (spatial must be >= kernel_size=10).
    N, H, W = 2, 16, 16
    x = jax.random.normal(kx, (N, C_IN, H, W), dtype=jnp.float32)

    # Deterministic Conv2d-style init (uniform in +/- 1/sqrt(fan_in)).
    fan_in = C_IN * K * K
    bound = 1.0 / (fan_in ** 0.5)
    w = jax.random.uniform(kw, (C_OUT, C_IN, K, K), jnp.float32, -bound, bound)
    b = jax.random.uniform(kb, (C_OUT,), jnp.float32, -bound, bound)

    out = jax.block_until_ready(net_forward(x, w, b))
    ref = reference_forward(x, w, b)

    assert out.shape == (N, C_OUT), out.shape
    # bf16 input/weight streaming (f32 accumulate) -> slightly looser tolerance.
    assert jnp.allclose(out, ref, rtol=2e-2, atol=2e-2), (out, ref)
    print("KERNEL_OK")
</pallas_src>

<mosaic_0001>
module attributes {stable_mosaic.version = 11 : i64} {
  func.func @fused_conv_mean_logsoftmax_kernel(%arg0: i32, %arg1: memref<8x256xbf16, #tpu.memory_space<vmem>>, %arg2: memref<256x128xbf16, #tpu.memory_space<vmem>>, %arg3: memref<1x128xf32, #tpu.memory_space<vmem>>, %arg4: memref<8x128xf32, #tpu.memory_space<vmem>>) attributes {dimension_semantics = [#tpu.dimension_semantics<parallel>], iteration_bounds = array<i64: 1>, scalar_prefetch = 0 : i64, scratch_operands = 0 : i64, tpu.core_type = #tpu.core_type<tc>, window_params = [{transform_indices = @transform_0, window_bounds = array<i64: 8, 256>}, {pipeline_mode = #tpu.pipeline_mode<synchronous>, transform_indices = @transform_1, window_bounds = array<i64: 256, 128>}, {pipeline_mode = #tpu.pipeline_mode<synchronous>, transform_indices = @transform_2, window_bounds = array<i64: 1, 128>}, {transform_indices = @transform_3, window_bounds = array<i64: 8, 128>}]} {
    %c0 = arith.constant 0 : index
    %c0_0 = arith.constant 0 : index
    %0 = vector.load %arg1[%c0, %c0_0] : memref<8x256xbf16, #tpu.memory_space<vmem>>, vector<8x256xbf16>
    %c0_1 = arith.constant 0 : index
    %c0_2 = arith.constant 0 : index
    %1 = vector.load %arg2[%c0_1, %c0_2] : memref<256x128xbf16, #tpu.memory_space<vmem>>, vector<256x128xbf16>
    %cst = arith.constant dense<0.000000e+00> : vector<8x128xf32>
    %2 = tpu.matmul %0, %1, %cst {dimension_numbers = #tpu.dot_dimension_numbers<[1], [0], [0], [1], [0, 0, 1, 1], [], []>} : vector<8x256xbf16>, vector<256x128xbf16>, vector<8x128xf32> -> vector<8x128xf32>
    %c0_3 = arith.constant 0 : index
    %c0_4 = arith.constant 0 : index
    %3 = vector.load %arg3[%c0_3, %c0_4] : memref<1x128xf32, #tpu.memory_space<vmem>>, vector<1x128xf32>
    %4 = vector.broadcast %3 : vector<1x128xf32> to vector<8x128xf32>
    %5 = arith.addf %2, %4 : vector<8x128xf32>
    %cst_5 = arith.constant dense<0xFF800000> : vector<8xf32>
    %6 = vector.multi_reduction <maximumf>, %5, %cst_5 [1] : vector<8x128xf32> to vector<8xf32>
    %7 = vector.shape_cast %6 : vector<8xf32> to vector<8x1xf32>
    %8 = vector.broadcast %7 : vector<8x1xf32> to vector<8x128xf32>
    %9 = arith.subf %5, %8 : vector<8x128xf32>
    %10 = math.exp %9 : vector<8x128xf32>
    %cst_6 = arith.constant dense<0.000000e+00> : vector<8xf32>
    %11 = vector.multi_reduction <add>, %10, %cst_6 [1] : vector<8x128xf32> to vector<8xf32>
    %12 = vector.shape_cast %11 : vector<8xf32> to vector<8x1xf32>
    %13 = math.log %12 : vector<8x1xf32>
    %14 = vector.broadcast %13 : vector<8x1xf32> to vector<8x128xf32>
    %15 = arith.subf %9, %14 : vector<8x128xf32>
    %c0_7 = arith.constant 0 : index
    %c0_8 = arith.constant 0 : index
    %16 = vector.load %arg4[%c0_7, %c0_8] : memref<8x128xf32, #tpu.memory_space<vmem>>, vector<8x128xf32>
    tpu.vector_store %arg4[%c0_7, %c0_8], %15 {strides = array<i32>} : memref<8x128xf32, #tpu.memory_space<vmem>>, vector<8x128xf32>,
    return
  }
  func.func @transform_0(%arg0: i32) -> (i32, i32) {
    %c0_i32 = arith.constant 0 : i32
    %c0_i32_0 = arith.constant 0 : i32
    return %arg0, %c0_i32 : i32, i32
  }
  func.func @transform_1(%arg0: i32) -> (i32, i32) {
    %c0_i32 = arith.constant 0 : i32
    %c0_i32_0 = arith.constant 0 : i32
    %c0_i32_1 = arith.constant 0 : i32
    return %c0_i32, %c0_i32_0 : i32, i32
  }
  func.func @transform_2(%arg0: i32) -> (i32, i32) {
    %c0_i32 = arith.constant 0 : i32
    %c0_i32_0 = arith.constant 0 : i32
    %c0_i32_1 = arith.constant 0 : i32
    return %c0_i32, %c0_i32_0 : i32, i32
  }
  func.func @transform_3(%arg0: i32) -> (i32, i32) {
    %c0_i32 = arith.constant 0 : i32
    %c0_i32_0 = arith.constant 0 : i32
    return %arg0, %c0_i32 : i32, i32
  }
}

</mosaic_0001>

<llo_original>
// kernel: net_forward.1
$region0: #{net_forward.1}
  #allocation0 [shape = 'u32[]', space=smem, size = 0x4, offset = 0x4, fixed_abs, tag = 'smem constant byte address 0x4 - core index']
  #allocation1 [shape = 'u32[144,128]{1,0:T(1,128)}', space=vmem, size = 0x12000, scoped, tag = 'internal scratch']
  %s0 = inlined_call_operand.vmem [shape: bf16[2,256], index: 0, kind: input, shape index: {}]
  %s1 = inlined_call_operand.vmem [shape: bf16[256,128], index: 1, kind: input, shape index: {}]
  %s2 = inlined_call_operand.vmem [shape: f32[1,128], index: 2, kind: input, shape index: {}]
  %s3 = inlined_call_operand.hbm [shape: f32[2,128], index: 3, kind: output, shape index: {}]
  %s4 = sld [smem:[#allocation0]]
  $region22: #{net_forward.1} parent=0
    _
  %s6 = ssub.s32 1, %s4
  %s7 = scalar_select 0, %s6, %s4
  $region1: #{net_forward.1} parent=0
    #allocation2 [shape = 'u8[4096]{0}', space=vmem, size = 0x1000, scoped, tag = 'output window, operand 0, single buffered']
    #allocation3 [shape = 's32[1]{0}', space=sflag, size = 0x4, scoped, tag = 'scoped memory for net_forward.1']
    %8 = vsyncpa [#allocation3], 0
    // Predicated region
    $region2: #{net_forward.1} parent=1 // pred_check
      _
    $region3: #{net_forward.1} parent=1 // pred_check_branch
      %10 = sbr.rel (0) target = $region5
    $region4: #{net_forward.1} parent=1 // pred_region
      _
    $region5: #{net_forward.1} parent=1 // pred_fallthru
      _
    // Predicated region
    $region6: #{net_forward.1} parent=1 // pred_check
      _
    $region7: #{net_forward.1} parent=1 // pred_check_branch
      %12 = sbr.rel (0) target = $region9
    $region8: #{net_forward.1} parent=1 // pred_region
      _
    $region9: #{net_forward.1} parent=1 // pred_fallthru
      _
    // Predicated region
    $region10: #{net_forward.1} parent=1 // pred_check
      _
    $region11: #{net_forward.1} parent=1 // pred_check_branch
      %14 = sbr.rel (0) target = $region13
    $region12: #{net_forward.1} parent=1 // pred_region
      _
    $region13: #{net_forward.1} parent=1 // pred_fallthru
      _
    %v16 = vld [vmem:[%s0] sm:$0x3]
    %v17 = vld [vmem:[%s0 + $0x2] sm:$0x3]
    %v18 = vld [vmem:[%s0 + $0x4] sm:$0x3]
    %v19 = vld [vmem:[%s0 + $0x6] sm:$0x3]
    %v20 = vld [vmem:[%s1] sm:$0xf]
    %v21 = vld [vmem:[%s1 + $0x4] sm:$0xf]
    %v22 = vld [vmem:[%s1 + $0x8] sm:$0xf]
    %v23 = vld [vmem:[%s1 + $0xc] sm:$0xf]
    %v24 = vld [vmem:[%s1 + $0x10] sm:$0xf]
    %v25 = vld [vmem:[%s1 + $0x14] sm:$0xf]
    %v26 = vld [vmem:[%s1 + $0x18] sm:$0xf]
    %v27 = vld [vmem:[%s1 + $0x1c] sm:$0xf]
    %v28 = vld [vmem:[%s1 + $0x20] sm:$0xf]
    %v29 = vld [vmem:[%s1 + $0x24] sm:$0xf]
    %v30 = vld [vmem:[%s1 + $0x28] sm:$0xf]
    %v31 = vld [vmem:[%s1 + $0x2c] sm:$0xf]
    %v32 = vld [vmem:[%s1 + $0x30] sm:$0xf]
    %v33 = vld [vmem:[%s1 + $0x34] sm:$0xf]
    %v34 = vld [vmem:[%s1 + $0x38] sm:$0xf]
    %v35 = vld [vmem:[%s1 + $0x3c] sm:$0xf]
    %v36 = vld [vmem:[%s1 + $0x40] sm:$0xf]
    %v37 = vld [vmem:[%s1 + $0x44] sm:$0xf]
    %v38 = vld [vmem:[%s1 + $0x48] sm:$0xf]
    %v39 = vld [vmem:[%s1 + $0x4c] sm:$0xf]
    %v40 = vld [vmem:[%s1 + $0x50] sm:$0xf]
    %v41 = vld [vmem:[%s1 + $0x54] sm:$0xf]
    %v42 = vld [vmem:[%s1 + $0x58] sm:$0xf]
    %v43 = vld [vmem:[%s1 + $0x5c] sm:$0xf]
    %v44 = vld [vmem:[%s1 + $0x60] sm:$0xf]
    %v45 = vld [vmem:[%s1 + $0x64] sm:$0xf]
    %v46 = vld [vmem:[%s1 + $0x68] sm:$0xf]
    %v47 = vld [vmem:[%s1 + $0x6c] sm:$0xf]
    %v48 = vld [vmem:[%s1 + $0x70] sm:$0xf]
    %v49 = vld [vmem:[%s1 + $0x74] sm:$0xf]
    %v50 = vld [vmem:[%s1 + $0x78] sm:$0xf]
    %v51 = vld [vmem:[%s1 + $0x7c] sm:$0xf]
    %v52 = vld [vmem:[%s2] sm:$0x1]
    %v54 = vlaneseq
    %v55 = vshrl.u32 %v54, 7
    %v56 = vsub.s32 0, %v55
    %v57 = vrot.slane %v52, %v56
    %v63 = vcombine.low %v16, %v17
    %v64 = vcombine.low %v18, %v19
    %v66 = vunpack.c.l.s4 1966171168
    %v67 = vunpack.c.0.s8 %v66
    %v68 = vlaneseq
    %v69 = vshrl.u32 %v68, 7
    %v70 = vsub.s32 %v67, %v69
    %v71 = vrot.slane %v63, %v70
    %v73 = vunpack.c.l.s4 1966171168
    %v74 = vunpack.c.0.s8 %v73
    %v75 = vlaneseq
    %v76 = vshrl.u32 %v75, 7
    %v77 = vsub.s32 %v74, %v76
    %v78 = vrot.slane %v64, %v77
    %v79 = vcombine.low %v71, %v78
    %v80 = vcombine.high %v71, %v78
    %v82 = vunpack.c.l.s4 1966171168
    %v83 = vunpack.c.0.s8 %v82
    %v84 = vlaneseq
    %v85 = vshrl.u32 %v84, 7
    %v86 = vsub.s32 %v83, %v85
    %v87 = vrot.slane %v79, %v86
    %v89 = vunpack.c.l.s4 1966171168
    %v90 = vunpack.c.0.s8 %v89
    %v91 = vlaneseq
    %v92 = vshrl.u32 %v91, 7
    %v93 = vsub.s32 %v90, %v92
    %v94 = vrot.slane %v80, %v93
    %v129 = vunpack.c.l.b16 %v20
    %v130 = vunpack.c.l.b16 %v21
    %v131 = vunpack.c.l.b16 %v22
    %v132 = vunpack.c.l.b16 %v23
    %v133 = vunpack.c.l.b16 %v24
    %v134 = vunpack.c.l.b16 %v25
    %v135 = vunpack.c.l.b16 %v26
    %v136 = vunpack.c.l.b16 %v27
    %v137 = vunpack.c.l.b16 %v28
    %v138 = vunpack.c.l.b16 %v29
    %v139 = vunpack.c.l.b16 %v30
    %v140 = vunpack.c.l.b16 %v31
    %v141 = vunpack.c.l.b16 %v32
    %v142 = vunpack.c.l.b16 %v33
    %v143 = vunpack.c.l.b16 %v34
    %v144 = vunpack.c.l.b16 %v35
    %v145 = vunpack.c.l.b16 %v36
    %v146 = vunpack.c.l.b16 %v37
    %v147 = vunpack.c.l.b16 %v38
    %v148 = vunpack.c.l.b16 %v39
    %v149 = vunpack.c.l.b16 %v40
    %v150 = vunpack.c.l.b16 %v41
    %v151 = vunpack.c.l.b16 %v42
    %v152 = vunpack.c.l.b16 %v43
    %v153 = vunpack.c.l.b16 %v44
    %v154 = vunpack.c.l.b16 %v45
    %v155 = vunpack.c.l.b16 %v46
    %v156 = vunpack.c.l.b16 %v47
    %v157 = vunpack.c.l.b16 %v48
    %v158 = vunpack.c.l.b16 %v49
    %v159 = vunpack.c.l.b16 %v50
    %v160 = vunpack.c.l.b16 %v51
    %v161 = vpack.c.b16 %v130, %v129
    %v162 = vpack.c.b16 %v132, %v131
    %v163 = vpack.c.b16 %v134, %v133
    %v164 = vpack.c.b16 %v136, %v135
    %v165 = vpack.c.b16 %v138, %v137
    %v166 = vpack.c.b16 %v140, %v139
    %v167 = vpack.c.b16 %v142, %v141
    %v168 = vpack.c.b16 %v144, %v143
    %v169 = vpack.c.b16 %v146, %v145
    %v170 = vpack.c.b16 %v148, %v147
    %v171 = vpack.c.b16 %v150, %v149
    %v172 = vpack.c.b16 %v152, %v151
    %v173 = vpack.c.b16 %v154, %v153
    %v174 = vpack.c.b16 %v156, %v155
    %v175 = vpack.c.b16 %v158, %v157
    %v176 = vpack.c.b16 %v160, %v159
    %193 = vmatprep.subr.bf16.mxu0 0
    %194 = vmatpush1.bf16.msra.mxu0 %v168
    %195 = vmatprep.subr.bf16.mxu0 0
    %196 = vmatpush1.bf16.msra.mxu0 %v167
    %197 = vmatprep.subr.bf16.mxu0 0
    %198 = vmatpush1.bf16.msra.mxu0 %v166
    %199 = vmatprep.subr.bf16.mxu0 0
    %200 = vmatpush1.bf16.msra.mxu0 %v165
    %201 = vmatprep.subr.bf16.mxu0 0
    %202 = vmatpush1.bf16.msra.mxu0 %v164
    %203 = vmatprep.subr.bf16.mxu0 0
    %204 = vmatpush1.bf16.msra.mxu0 %v163
    %205 = vmatprep.subr.bf16.mxu0 0
    %206 = vmatpush1.bf16.msra.mxu0 %v162
    %207 = vmatprep.subr.bf16.mxu0 0
    %208 = vmatpush1.bf16.msra.mxu0 %v161
    %209 = vmatprep.subr.bf16.mxu0 0
    %210 = vmatpush2.bf16.msra.mxu0 %v176
    %211 = vmatprep.subr.bf16.mxu0 0
    %212 = vmatpush2.bf16.msra.mxu0 %v175
    %213 = vmatprep.subr.bf16.mxu0 0
    %214 = vmatpush2.bf16.msra.mxu0 %v174
    %215 = vmatprep.subr.bf16.mxu0 0
    %216 = vmatpush2.bf16.msra.mxu0 %v173
    %217 = vmatprep.subr.bf16.mxu0 0
    %218 = vmatpush2.bf16.msra.mxu0 %v172
    %219 = vmatprep.subr.bf16.mxu0 0
    %220 = vmatpush2.bf16.msra.mxu0 %v171
    %221 = vmatprep.subr.bf16.mxu0 0
    %222 = vmatpush2.bf16.msra.mxu0 %v170
    %223 = vmatprep.subr.bf16.mxu0 0
    %224 = vmatpush2.bf16.msra.mxu0 %v169
    %225 = vmatprep.mubr.bf16.mxu0 %v94
    %226 = vmatmul.mubr.bf16.gmra.mxu0 %v87
    %v227 = vpop.f32.mrf.mxu0
    %v228 = vadd.f32 %v57, %v227
    %v229 = vpop.f32.mrf.mxu0
    %v230 = vpop.f32.mrf.mxu0
    %v231 = vpop.f32.mrf.mxu0
    %232 = vdwg.mxu0
    %233 = vmax.xlane.f32.xlu0 %v228
    %v234 = vpop.xlane.xlu0 %233
    %v235 = vsub.f32 %v228, %v234
    %v236 = vmul.f32 %v235, 1.442695
    %v237 = vpow.pop %v236
    %238 = vadd.xlane.f32.xlu0 %v237
    %v239 = vpop.xlane.xlu0 %238
    %v240 = vlog2.pop %v239
    %v241 = vmul.f32 %v240, 0.6931472
    %v242 = vsub.f32 %v235, %v241
    %243 = vst [vmem:[#allocation2] sm:$0xff] %v242
    // Predicated region
    $region14: #{net_forward.1} parent=1 // pred_check
      _
    $region15: #{net_forward.1} parent=1 // pred_check_branch
      %245 = sbr.rel (0) target = $region17
    $region16: #{net_forward.1} parent=1 // pred_region
      %s247 = ssub.s32 128, 32
      %248 = vsyncadd [#allocation3], %s247
      %s249 = sshll.u32 [#allocation2], 4
      %s250 = int_to_ptr.vmem [resolvable:$true] %s249
      %255 = dma.vmem_to_hbm [thread:$0]  %s250, 32, %s3, [#allocation3], 32, 32, 2
    $region17: #{net_forward.1} parent=1 // pred_fallthru
      _
    // Predicated region
    $region18: #{net_forward.1} parent=1 // pred_check
      _
    $region19: #{net_forward.1} parent=1 // pred_check_branch
      %257 = sbr.rel (0) target = $region21
    $region20: #{net_forward.1} parent=1 // pred_region
      %258 = dma.done [#allocation3], 128
    $region21: #{net_forward.1} parent=1 // pred_fallthru
      _
    %259 = vsyncpa [#allocation3], 1

</llo_original>
